<compile_context>
chip_gen: v5e
topology: v5e:2x2
jax: 0.10.0
libtpu: 0.0.40
codegen_flags: <defaults>
</compile_context>

<pallas_src>
import math
import functools

import jax
import jax.numpy as jnp
from jax.experimental import pallas as pl
from jax.experimental.pallas import tpu as pltpu


def _pair(v):
    return tuple(v) if isinstance(v, (tuple, list)) else (v, v)


def _cdiv(a, b):
    return -(-a // b)


def _round_up(v, m):
    return ((v + m - 1) // m) * m


def _pad_axis(a, axis, target):
    pad = target - a.shape[axis]
    if pad <= 0:
        return a
    widths = [(0, 0)] * a.ndim
    widths[axis] = (0, pad)
    return jnp.pad(a, widths)


_VMEM_CAP = None


def _vmem_capacity_bytes():
    global _VMEM_CAP
    if _VMEM_CAP is None:
        try:
            _VMEM_CAP = int(pltpu.get_tpu_info().vmem_capacity_bytes)
        except Exception:
            _VMEM_CAP = 64 << 20          # conservative (v7x-sized) fallback
    return _VMEM_CAP


# ---------------------------------------------------------------------------
# Tiling plan
# ---------------------------------------------------------------------------
def _split_tile(extent128, tmax):
    """Tile size T (multiple of 128, <= tmax) and padded extent Ep = T * n."""
    if extent128 <= tmax:
        return extent128, extent128
    n0 = _cdiv(extent128, tmax)
    cands = []
    for n in range(n0, n0 + 8):
        t = min(_round_up(_cdiv(extent128, n), 128), tmax)
        ep = t * _cdiv(extent128, t)
        cands.append((t, ep))
    # Prefer the largest tile whose padding overhead is <= ~1/6; otherwise the
    # candidate with the least padding (larger tile on ties).
    ok = [c for c in cands if c[1] * 6 <= extent128 * 7]
    if ok:
        return max(ok, key=lambda c: c[0])
    return min(cands, key=lambda c: (c[1], -c[0]))


def _plan_tiles(P, Fg, Og, out_itemsize):
    vmem_cap = _vmem_capacity_bytes()
    budget = int(vmem_cap * 0.55)
    OgP = _round_up(Og, 16)               # bf16 sublane packing for the weight
    P128 = _round_up(P, 128)
    F128 = _round_up(Fg, 128)
    tp_max = 1024 if vmem_cap >= (100 << 20) else 512   # v5e/v6e vs v7x
    tf_max = 2048

    TP, Pp = _split_tile(P128, tp_max)
    TF, Fp = _split_tile(F128, tf_max)
    w_res = True

    def est(tp, tf, fp, res):
        col = 2 * tp * tf * 2                           # double-buffered bf16
        w = 2 * OgP * (fp if res else tf) * 2           # resident or tiled
        b = 2 * OgP * 128 * 4
        out = 2 * OgP * tp * out_itemsize
        acc = OgP * tp * 4
        return col + w + b + out + acc

    # Shrink TF first, then drop weight residency, then TP (review order).
    while est(TP, TF, Fp, w_res) > budget:
        if TF > 128:
            tf_max = max(128, min(TF - 128, tf_max // 2))
            TF, Fp = _split_tile(F128, tf_max)
            continue
        if w_res:
            w_res = False
            continue
        if TP > 128:
            tp_max = max(128, min(TP - 128, tp_max // 2))
            TP, Pp = _split_tile(P128, tp_max)
            continue
        break

    vmem_limit = int(max(32 << 20,
                         min(int(vmem_cap * 0.75),
                             est(TP, TF, Fp, w_res) + (8 << 20))))
    return TP, TF, Pp, Fp, OgP, w_res, vmem_limit


# ---------------------------------------------------------------------------
# Pallas kernel: out[g,n,:,p] = W_g @ col[g,n,:,p] + b_g   (bf16 MXU, f32 acc)
# ---------------------------------------------------------------------------
def _dcn_matmul_kernel(col_ref, w_ref, b_ref, out_ref, acc_ref, *, tf, w_resident):
    # col_ref : (1, 1, TF, TP) bf16      w_ref : (1, OgP, Fp|TF) bf16
    # b_ref   : (1, OgP, 1)    f32       out_ref: (1, 1, OgP, TP) out dtype
    # acc_ref : (OgP, TP)      f32 scratch (persists across the F axis)
    f = pl.program_id(3)

    @pl.when(f == 0)
    def _():
        acc_ref[...] = jnp.zeros_like(acc_ref)

    if w_resident:
        fo = pl.multiple_of(f * tf, 128)
        w_blk = w_ref[0, :, pl.ds(fo, tf)]          # slice the resident weight
    else:
        w_blk = w_ref[0]

    acc_ref[...] += jnp.dot(w_blk, col_ref[0, 0],
                            preferred_element_type=jnp.float32)

    @pl.when(f == pl.num_programs(3) - 1)
    def _():
        out_ref[0, 0] = (acc_ref[...] + b_ref[0]).astype(out_ref.dtype)


def _dcn_matmul(col, w, b, *, out_dtype, tp, tf, w_resident, vmem_limit):
    # col: (N, G, Fp, Pp) bf16   w: (G, OgP, Fp) bf16   b: (G, OgP, 1) f32
    N, G, Fp, Pp = col.shape
    OgP = w.shape[1]
    grid = (G, N, Pp // tp, Fp // tf)
    kernel = functools.partial(_dcn_matmul_kernel, tf=tf, w_resident=w_resident)
    if w_resident:
        # Whole per-group weight stays in VMEM; re-DMA'd only when g changes.
        w_spec = pl.BlockSpec((1, OgP, Fp), lambda g, n, p, f: (g, 0, 0))
    else:
        w_spec = pl.BlockSpec((1, OgP, tf), lambda g, n, p, f: (g, 0, f))
    return pl.pallas_call(
        kernel,
        out_shape=jax.ShapeDtypeStruct((N, G, OgP, Pp), out_dtype),
        grid_spec=pltpu.PrefetchScalarGridSpec(
            num_scalar_prefetch=0,
            grid=grid,
            in_specs=[
                pl.BlockSpec((1, 1, tf, tp), lambda g, n, p, f: (n, g, f, p)),
                w_spec,
                pl.BlockSpec((1, OgP, 1), lambda g, n, p, f: (g, 0, 0)),
            ],
            out_specs=pl.BlockSpec((1, 1, OgP, tp),
                                   lambda g, n, p, f: (n, g, 0, p)),
            scratch_shapes=[pltpu.VMEM((OgP, tp), jnp.float32)],
        ),
        compiler_params=pltpu.CompilerParams(
            dimension_semantics=("parallel", "parallel", "parallel", "arbitrary"),
            vmem_limit_bytes=int(vmem_limit)),
    )(col, w, b)


# ---------------------------------------------------------------------------
# Deformable im2col (bilinear sampling, mmcv boundary semantics) — XLA glue.
# Mask is fused in and the bf16 cast happens before any layout op; the column
# tensor is produced directly in the kernel's (N, G, F, P) layout (no transpose)
# and at the padded (Fp, Pp) extents (no separate pad pass).
# ---------------------------------------------------------------------------
def _deform_im2col(x, offset, mask, kh, kw, stride, padding, dilation,
                   deform_groups, groups, Ho, Wo, Pp, Fp,
                   col_dtype=jnp.bfloat16):
    N, Cin, H, W = x.shape
    sh, sw = stride
    ph, pw = padding
    dh, dw = dilation
    K = kh * kw
    DG = deform_groups
    Cdg = Cin // DG
    G = groups

    # offset channel layout per deform group: [k, (y, x)]  -- same as mmcv
    off = offset.reshape(N, DG, K, 2, Ho, Wo).astype(jnp.float32)
    off_y, off_x = off[:, :, :, 0], off[:, :, :, 1]

    ky = (jnp.arange(K) // kw) * dh
    kx = (jnp.arange(K) % kw) * dw
    base_y = (jnp.arange(Ho) * sh - ph)[None, :, None] + ky[:, None, None]   # (K,Ho,1)
    base_x = (jnp.arange(Wo) * sw - pw)[None, None, :] + kx[:, None, None]   # (K,1,Wo)
    py = base_y[None, None] + off_y                                          # (N,DG,K,Ho,Wo)
    px = base_x[None, None] + off_x

    y0 = jnp.floor(py)
    x0 = jnp.floor(px)
    y1 = y0 + 1.0
    x1 = x0 + 1.0
    ly = py - y0
    hy = 1.0 - ly
    lx = px - x0
    hx = 1.0 - lx

    xg = x.astype(jnp.float32).reshape(N, DG, Cdg, H * W)

    def corner(yi, xi):
        valid = ((yi >= 0) & (yi <= H - 1) & (xi >= 0) & (xi <= W - 1)).astype(jnp.float32)
        yc = jnp.clip(yi, 0, H - 1).astype(jnp.int32)
        xc = jnp.clip(xi, 0, W - 1).astype(jnp.int32)
        flat = (yc * W + xc).reshape(N, DG, 1, K * Ho * Wo)
        flat = jnp.broadcast_to(flat, (N, DG, Cdg, K * Ho * Wo))
        vals = jnp.take_along_axis(xg, flat, axis=3).reshape(N, DG, Cdg, K, Ho, Wo)
        return vals * valid[:, :, None]

    v00 = corner(y0, x0)
    v01 = corner(y0, x1)
    v10 = corner(y1, x0)
    v11 = corner(y1, x1)
    w00 = (hy * hx)[:, :, None]
    w01 = (hy * lx)[:, :, None]
    w10 = (ly * hx)[:, :, None]
    w11 = (ly * lx)[:, :, None]
    sampled = v00 * w00 + v01 * w01 + v10 * w10 + v11 * w11     # (N,DG,Cdg,K,Ho,Wo) f32

    # Fuse modulation mask + cast to bf16 BEFORE any layout change.
    m = mask.reshape(N, DG, 1, K, Ho, Wo).astype(jnp.float32)
    sampled = (sampled * m).astype(col_dtype)

    # (N, DG, Cdg, K, Ho, Wo) -> (N, G, Cg*K, P): pure reshape (no transpose);
    # feature index = cg*K + k matches the OIHW per-group weight flatten.
    col = sampled.reshape(N, G, (Cin // G) * K, Ho * Wo)
    col = _pad_axis(_pad_axis(col, 2, Fp), 3, Pp)               # (N, G, Fp, Pp)
    return col


def _prepare(x, offset, mask, weight, bias, stride, padding, dilation,
             groups, deform_groups):
    stride = _pair(stride)
    padding = _pair(padding)
    dilation = _pair(dilation)
    N, Cin, H, W = x.shape
    Cout, Cgrp, kh, kw = weight.shape
    K = kh * kw
    G = groups
    Og = Cout // G
    Fg = Cgrp * K
    sh, sw = stride
    ph, pw = padding
    dh, dw = dilation
    Ho = (H + 2 * ph - (dh * (kh - 1) + 1)) // sh + 1
    Wo = (W + 2 * pw - (dw * (kw - 1) + 1)) // sw + 1
    P = Ho * Wo

    TP, TF, Pp, Fp, OgP, w_res, vmem_limit = _plan_tiles(
        P, Fg, Og, jnp.dtype(x.dtype).itemsize)

    col_p = _deform_im2col(x, offset, mask, kh, kw, stride, padding, dilation,
                           deform_groups, G, Ho, Wo, Pp, Fp)
    w_g = weight.reshape(G, Og, Fg).astype(jnp.bfloat16)        # pure reshape
    w_p = _pad_axis(_pad_axis(w_g, 1, OgP), 2, Fp)              # (G, OgP, Fp)
    b = bias if bias is not None else jnp.zeros((Cout,), jnp.float32)
    b_p = _pad_axis(b.astype(jnp.float32).reshape(G, Og), 1, OgP).reshape(G, OgP, 1)
    return col_p, w_p, b_p, (TP, TF, w_res, vmem_limit), (Ho, Wo, Og, P)


# ---------------------------------------------------------------------------
# Functional forward, equivalent to ModulatedDeformConv2dFunction.forward
# ---------------------------------------------------------------------------
@functools.partial(jax.jit, static_argnums=(5, 6, 7, 8, 9))
def modulated_deform_conv2d(x, offset, mask, weight, bias=None, stride=1,
                            padding=0, dilation=1, groups=1, deform_groups=1):
    N = x.shape[0]
    Cout = weight.shape[0]
    col_p, w_p, b_p, (TP, TF, w_res, vmem_limit), (Ho, Wo, Og, P) = _prepare(
        x, offset, mask, weight, bias, stride, padding, dilation,
        groups, deform_groups)

    out_p = _dcn_matmul(col_p, w_p, b_p, out_dtype=x.dtype, tp=TP, tf=TF,
                        w_resident=w_res, vmem_limit=vmem_limit)
    # (N, G, OgP, Pp) -> slice valid rows/cols -> contiguous reshape (no transpose)
    out = out_p[:, :, :Og, :P].reshape(N, Cout, Ho, Wo)
    return out


# ---------------------------------------------------------------------------
# Module wrapper, mirroring ModulatedDeformConv2d.__init__ / init_weights
# ---------------------------------------------------------------------------
class ModulatedDeformConv2d:
    def __init__(self, in_channels, out_channels, kernel_size, stride=1,
                 padding=0, dilation=1, groups=1, deform_groups=1, bias=True,
                 key=None):
        self.in_channels = in_channels
        self.out_channels = out_channels
        self.kernel_size = _pair(kernel_size)
        self.stride = _pair(stride)
        self.padding = _pair(padding)
        self.dilation = _pair(dilation)
        self.groups = groups
        self.deform_groups = deform_groups

        kh, kw = self.kernel_size
        n = in_channels * kh * kw
        stdv = 1.0 / math.sqrt(n)
        key = key if key is not None else jax.random.PRNGKey(0)
        self.weight = jax.random.uniform(
            key, (out_channels, in_channels // groups, kh, kw),
            minval=-stdv, maxval=stdv, dtype=jnp.float32)
        self.bias = jnp.zeros((out_channels,), jnp.float32) if bias else None

    def __call__(self, x, offset, mask):
        return modulated_deform_conv2d(
            x, offset, mask, self.weight, self.bias, self.stride, self.padding,
            self.dilation, self.groups, self.deform_groups)


if __name__ == "__main__":
    key = jax.random.PRNGKey(0)
    kx, ko, km, kw_ = jax.random.split(key, 4)

    N, Cin, H, W = 2, 4, 16, 16
    Cout, ksz, dg = 8, 3, 2
    K = ksz * ksz

    x = jax.random.normal(kx, (N, Cin, H, W), jnp.float32)
    offset = 2.0 * jax.random.normal(ko, (N, 2 * dg * K, H, W), jnp.float32)
    mask = jax.nn.sigmoid(jax.random.normal(km, (N, dg * K, H, W), jnp.float32))

    # --- groups = 1 ---
    conv = ModulatedDeformConv2d(
        Cin, Cout, ksz, stride=1, padding=1, dilation=1,
        groups=1, deform_groups=dg, bias=True, key=kw_)
    out = jax.block_until_ready(conv(x, offset, mask))
    assert out.shape == (N, Cout, H, W), out.shape

    # Tight check: reference built from the SAME bf16 columns / weights, so the
    # Pallas matmul / tiling / padding / group path is validated exactly.
    col_p, w_p, b_p, _, (Ho, Wo, Og, P) = _prepare(
        x, offset, mask, conv.weight, conv.bias, (1, 1), (1, 1), (1, 1), 1, dg)
    ref = jnp.einsum("gof,ngfp->ngop",
                     w_p.astype(jnp.float32), col_p.astype(jnp.float32))
    ref = (ref + b_p[None])[:, :, :Og, :P].reshape(N, Cout, Ho, Wo)
    err = float(jnp.max(jnp.abs(out.astype(jnp.float32) - ref)))
    assert err < 2e-2, err

    # Loose f32-parity check (bounds the bf16 column/weight quantization error
    # against a fully-f32 im2col reference).
    Fg = Cin * K
    col32 = _deform_im2col(x, offset, mask, ksz, ksz, (1, 1), (1, 1), (1, 1),
                           dg, 1, Ho, Wo, P, Fg, col_dtype=jnp.float32)
    ref32 = jnp.einsum("gof,ngfp->ngop",
                       conv.weight.reshape(1, Cout, Fg).astype(jnp.float32),
                       col32)
    ref32 = (ref32 + conv.bias.reshape(1, 1, Cout, 1)).reshape(N, Cout, Ho, Wo)
    err32 = float(jnp.max(jnp.abs(out.astype(jnp.float32) - ref32)))
    assert err32 < 1e-1, err32

    # --- groups = 2 (exercises the per-group grid axis / resident weight) ---
    conv2 = ModulatedDeformConv2d(
        Cin, Cout, ksz, stride=1, padding=1, dilation=1,
        groups=2, deform_groups=dg, bias=True, key=kw_)
    out2 = jax.block_until_ready(conv2(x, offset, mask))
    assert out2.shape == (N, Cout, H, W), out2.shape

    col_p2, w_p2, b_p2, _, (Ho2, Wo2, Og2, P2) = _prepare(
        x, offset, mask, conv2.weight, conv2.bias, (1, 1), (1, 1), (1, 1), 2, dg)
    ref2 = jnp.einsum("gof,ngfp->ngop",
                      w_p2.astype(jnp.float32), col_p2.astype(jnp.float32))
    ref2 = (ref2 + b_p2[None])[:, :, :Og2, :P2].reshape(N, Cout, Ho2, Wo2)
    err2 = float(jnp.max(jnp.abs(out2.astype(jnp.float32) - ref2)))
    assert err2 < 2e-2, err2

    print("KERNEL_OK")
</pallas_src>

<mosaic_0001>
module attributes {stable_mosaic.version = 11 : i64} {
  func.func @_dcn_matmul_kernel(%arg0: i32, %arg1: i32, %arg2: i32, %arg3: i32, %arg4: memref<1x1x128x256xbf16, #tpu.memory_space<vmem>>, %arg5: memref<1x16x128xbf16, #tpu.memory_space<vmem>>, %arg6: memref<1x16x1xf32, #tpu.memory_space<vmem>>, %arg7: memref<1x1x16x256xf32, #tpu.memory_space<vmem>>, %arg8: memref<16x256xf32, #tpu.memory_space<vmem>>) attributes {dimension_semantics = [#tpu.dimension_semantics<parallel>, #tpu.dimension_semantics<parallel>, #tpu.dimension_semantics<parallel>, #tpu.dimension_semantics<arbitrary>], iteration_bounds = array<i64: 1, 2, 1, 1>, scalar_prefetch = 0 : i64, scratch_operands = 1 : i64, tpu.core_type = #tpu.core_type<tc>, window_params = [{transform_indices = @transform_0, window_bounds = array<i64: 1, 1, 128, 256>}, {transform_indices = @transform_1, window_bounds = array<i64: 1, 16, 128>}, {transform_indices = @transform_2, window_bounds = array<i64: 1, 16, 1>}, {transform_indices = @transform_3, window_bounds = array<i64: 1, 1, 16, 256>}]} {
    %c0_i32 = arith.constant 0 : i32
    %0 = arith.cmpi eq, %arg3, %c0_i32 : i32
    %1 = arith.extui %0 : i1 to i32
    %c0_i32_0 = arith.constant 0 : i32
    %2 = arith.cmpi ne, %1, %c0_i32_0 : i32
    scf.if %2 {
      %cst_12 = arith.constant 0.000000e+00 : f32
      %17 = vector.broadcast %cst_12 : f32 to vector<16x256xf32>
      %c0_13 = arith.constant 0 : index
      %c0_14 = arith.constant 0 : index
      %18 = vector.load %arg8[%c0_13, %c0_14] : memref<16x256xf32, #tpu.memory_space<vmem>>, vector<16x256xf32>
      tpu.vector_store %arg8[%c0_13, %c0_14], %17 {strides = array<i32>} : memref<16x256xf32, #tpu.memory_space<vmem>>, vector<16x256xf32>,
    } else {
    }
    %c128_i32 = arith.constant 128 : i32
    %3 = arith.muli %arg3, %c128_i32 : i32
    %4 = tpu.assume_multiple %3, 128 : i32
    %c0 = arith.constant 0 : index
    %c0_1 = arith.constant 0 : index
    %5 = arith.index_cast %4 : i32 to index
    %6 = vector.load %arg5[%c0, %c0_1, %5] : memref<1x16x128xbf16, #tpu.memory_space<vmem>>, vector<1x16x128xbf16>
    %7 = vector.shape_cast %6 : vector<1x16x128xbf16> to vector<16x128xbf16>
    %c0_2 = arith.constant 0 : index
    %c0_3 = arith.constant 0 : index
    %8 = vector.load %arg8[%c0_2, %c0_3] : memref<16x256xf32, #tpu.memory_space<vmem>>, vector<16x256xf32>
    %c0_4 = arith.constant 0 : index
    %c0_5 = arith.constant 0 : index
    %c0_6 = arith.constant 0 : index
    %c0_7 = arith.constant 0 : index
    %9 = vector.load %arg4[%c0_4, %c0_5, %c0_6, %c0_7] : memref<1x1x128x256xbf16, #tpu.memory_space<vmem>>, vector<1x1x128x256xbf16>
    %10 = vector.shape_cast %9 : vector<1x1x128x256xbf16> to vector<128x256xbf16>
    %cst = arith.constant dense<0.000000e+00> : vector<16x256xf32>
    %11 = tpu.matmul %7, %10, %cst {dimension_numbers = #tpu.dot_dimension_numbers<[1], [0], [0], [1], [0, 0, 1, 1], [], []>} : vector<16x128xbf16>, vector<128x256xbf16>, vector<16x256xf32> -> vector<16x256xf32>
    %12 = arith.addf %8, %11 : vector<16x256xf32>
    %c0_8 = arith.constant 0 : index
    %c0_9 = arith.constant 0 : index
    %13 = vector.load %arg8[%c0_8, %c0_9] : memref<16x256xf32, #tpu.memory_space<vmem>>, vector<16x256xf32>
    tpu.vector_store %arg8[%c0_8, %c0_9], %12 {strides = array<i32>} : memref<16x256xf32, #tpu.memory_space<vmem>>, vector<16x256xf32>,
    %c0_i32_10 = arith.constant 0 : i32
    %14 = arith.cmpi eq, %arg3, %c0_i32_10 : i32
    %15 = arith.extui %14 : i1 to i32
    %c0_i32_11 = arith.constant 0 : i32
    %16 = arith.cmpi ne, %15, %c0_i32_11 : i32
    scf.if %16 {
      %c0_12 = arith.constant 0 : index
      %c0_13 = arith.constant 0 : index
      %17 = vector.load %arg8[%c0_12, %c0_13] : memref<16x256xf32, #tpu.memory_space<vmem>>, vector<16x256xf32>
      %c0_14 = arith.constant 0 : index
      %c0_15 = arith.constant 0 : index
      %c0_16 = arith.constant 0 : index
      %18 = vector.load %arg6[%c0_14, %c0_15, %c0_16] : memref<1x16x1xf32, #tpu.memory_space<vmem>>, vector<1x16x1xf32>
      %19 = vector.shape_cast %18 : vector<1x16x1xf32> to vector<16x1xf32>
      %20 = vector.broadcast %19 : vector<16x1xf32> to vector<16x256xf32>
      %21 = arith.addf %17, %20 : vector<16x256xf32>
      %c0_17 = arith.constant 0 : index
      %c0_18 = arith.constant 0 : index
      %c0_19 = arith.constant 0 : index
      %c0_20 = arith.constant 0 : index
      %22 = vector.load %arg7[%c0_17, %c0_18, %c0_19, %c0_20] : memref<1x1x16x256xf32, #tpu.memory_space<vmem>>, vector<1x1x16x256xf32>
      %23 = vector.shape_cast %22 : vector<1x1x16x256xf32> to vector<16x256xf32>
      %24 = vector.shape_cast %21 : vector<16x256xf32> to vector<1x1x16x256xf32>
      tpu.vector_store %arg7[%c0_17, %c0_18, %c0_19, %c0_20], %24 {strides = array<i32>} : memref<1x1x16x256xf32, #tpu.memory_space<vmem>>, vector<1x1x16x256xf32>,
    } else {
    }
    return
  }
  func.func @transform_0(%arg0: i32, %arg1: i32, %arg2: i32, %arg3: i32) -> (i32, i32, i32, i32) {
    %c0_i32 = arith.constant 0 : i32
    return %arg1, %arg0, %arg3, %arg2 : i32, i32, i32, i32
  }
  func.func @transform_1(%arg0: i32, %arg1: i32, %arg2: i32, %arg3: i32) -> (i32, i32, i32) {
    %c0_i32 = arith.constant 0 : i32
    %c0_i32_0 = arith.constant 0 : i32
    %c0_i32_1 = arith.constant 0 : i32
    return %arg0, %c0_i32, %c0_i32_0 : i32, i32, i32
  }
  func.func @transform_2(%arg0: i32, %arg1: i32, %arg2: i32, %arg3: i32) -> (i32, i32, i32) {
    %c0_i32 = arith.constant 0 : i32
    %c0_i32_0 = arith.constant 0 : i32
    %c0_i32_1 = arith.constant 0 : i32
    return %arg0, %c0_i32, %c0_i32_0 : i32, i32, i32
  }
  func.func @transform_3(%arg0: i32, %arg1: i32, %arg2: i32, %arg3: i32) -> (i32, i32, i32, i32) {
    %c0_i32 = arith.constant 0 : i32
    %c0_i32_0 = arith.constant 0 : i32
    return %arg1, %arg0, %c0_i32, %arg2 : i32, i32, i32, i32
  }
}

</mosaic_0001>

<llo_original>
// kernel: modulated_deform_conv2d.1
$region0: #{modulated_deform_conv2d.1}
  #allocation0 [shape = 'u32[]', space=smem, size = 0x4, offset = 0x4, fixed_abs, tag = 'smem constant byte address 0x4 - core index']
  #allocation1 [shape = 'u32[72,128]{1,0:T(1,128)}', space=vmem, size = 0x9000, scoped, tag = 'internal scratch']
  #allocation2 [shape = 'f32[16,256]{1,0:T(8,128)}', space=vmem, size = 0x4000, scoped, tag = 'scratch operand']
  %s0 = inlined_call_operand.vmem [shape: bf16[2,1,128,256], index: 0, kind: input, shape index: {}]
  %s1 = inlined_call_operand.vmem [shape: bf16[1,16,128], index: 1, kind: input, shape index: {}]
  %s2 = inlined_call_operand.vmem [shape: f32[1,16,1], index: 2, kind: input, shape index: {}]
  %s3 = inlined_call_operand.vmem [shape: f32[2,1,16,256], index: 3, kind: output, shape index: {}]
  %s4 = sld [smem:[#allocation0]]
  $region53: #{modulated_deform_conv2d.1} parent=0
    _
  %s6 = ssub.s32 1, %s4
  %s7 = scalar_select 0, %s6, %s4
  loop: start=0, step=1, limit=4
  $region2: #{modulated_deform_conv2d.1} parent=0 // loop_pre_header
    _
  $region3: #{modulated_deform_conv2d.1} parent=0 // loop_header
    %s9 = sphi 0, %s13
    %p10 = scmp.ge.s32.totalorder %s9, 4
    %s16 = sphi 0, %s42
    %s17 = sphi 0, %s38
    %s18 = sphi 0, %s34
    %s19 = sphi 0, %s30
    %s20 = sphi 0, %s16
    %s21 = sphi 0, %s17
    %s22 = sphi 0, %s18
    %s23 = sphi 0, %s19
    %s24 = sphi 0, %s20
    %s25 = sphi 0, %s21
    %s26 = sphi 0, %s22
    %s27 = sphi 0, %s23
    %s51 = sphi 0, %s53
    %s54 = sphi 0, %s51
    %s55 = sphi 0, %s54
    %s71 = sphi 0, %s55
    %s77 = sphi 0, %s79
    %s80 = sphi 0, %s77
    %s81 = sphi 0, %s80
    %s97 = sphi 0, %s81
    %s103 = sphi 0, %s105
    %s106 = sphi 0, %s103
    %s107 = sphi 0, %s106
    %s123 = sphi 0, %s107
    %s133 = sphi 0, %s135
    %s136 = sphi 0, %s133
    %s137 = sphi 0, %s136
    %s153 = sphi 0, %s137
  $region4: #{modulated_deform_conv2d.1} parent=0 // loop_header_branch
    %12 = sbr.rel (%p10) target = $region8
  $region5: #{modulated_deform_conv2d.1} parent=0 // loop_body
    %s14 = ssub.s32 %s9, 1
    %s15 = ssub.s32 %s9, 2
    %s28 = sadd.s32 1, %s19
    %p29 = scmp.ge.s32.totalorder %s28, 1
    %s30 = scalar_select %p29, 0, %s28
    %s31 = sadd.s32 1, %s18
    %s32 = scalar_select %p29, %s31, %s18
    %p33 = scmp.ge.s32.totalorder %s32, 1
    %s34 = scalar_select %p33, 0, %s32
    %s35 = sadd.s32 1, %s17
    %s36 = scalar_select %p33, %s35, %s17
    %p37 = scmp.ge.s32.totalorder %s36, 2
    %s38 = scalar_select %p37, 0, %s36
    %s39 = sadd.s32 1, %s16
    %s40 = scalar_select %p37, %s39, %s16
    %p41 = scmp.ge.s32.totalorder %s40, 1
    %s42 = scalar_select %p41, 0, %s40
    %s43 = ssub.s32 %s17, %s38
    %s44 = ssub.s32 %s16, %s42
    %s45 = sor.u32 %s43, %s44
    %s46 = ssub.s32 %s19, %s30
    %s47 = sor.u32 %s45, %s46
    %s48 = ssub.s32 %s18, %s34
    %s49 = sor.u32 %s47, %s48
    %p50 = scmp.eq.s32.totalorder %s49, 0
    %s52 = sadd.s32 %s51, 1
    %s53 = scalar_select %p50, %s51, %s52
    %p56 = pneg %p50
    %p57 = scmp.eq.s32.totalorder %s9, 1
    %p58 = por %p56, %p57
    %p59 = scmp.ne.s32.totalorder %s51, %s54
    %p60 = scmp.eq.s32.totalorder %s9, 0
    %p61 = por %p59, %p60
    %p62 = scmp.ne.s32.totalorder %s51, %s54
    %p63 = scmp.eq.s32.totalorder %s14, 1
    %p64 = por %p62, %p63
    %p65 = scmp.ne.s32.totalorder %s54, %s55
    %p66 = scmp.eq.s32.totalorder %s14, 0
    %p67 = por %p65, %p66
    %p68 = scmp.ne.s32.totalorder %s54, %s55
    %p69 = scmp.eq.s32.totalorder %s15, 1
    %p70 = por %p68, %p69
    %p72 = scmp.ne.s32.totalorder %s55, %s71
    %p73 = scmp.eq.s32.totalorder %s15, 0
    %p74 = por %p72, %p73
    %s75 = ssub.s32 %s16, %s42
    %p76 = scmp.eq.s32.totalorder %s75, 0
    %s78 = sadd.s32 %s77, 1
    %s79 = scalar_select %p76, %s77, %s78
    %p82 = pneg %p76
    %p83 = scmp.eq.s32.totalorder %s9, 1
    %p84 = por %p82, %p83
    %p85 = scmp.ne.s32.totalorder %s77, %s80
    %p86 = scmp.eq.s32.totalorder %s9, 0
    %p87 = por %p85, %p86
    %p88 = scmp.ne.s32.totalorder %s77, %s80
    %p89 = scmp.eq.s32.totalorder %s14, 1
    %p90 = por %p88, %p89
    %p91 = scmp.ne.s32.totalorder %s80, %s81
    %p92 = scmp.eq.s32.totalorder %s14, 0
    %p93 = por %p91, %p92
    %p94 = scmp.ne.s32.totalorder %s80, %s81
    %p95 = scmp.eq.s32.totalorder %s15, 1
    %p96 = por %p94, %p95
    %p98 = scmp.ne.s32.totalorder %s81, %s97
    %p99 = scmp.eq.s32.totalorder %s15, 0
    %p100 = por %p98, %p99
    %s101 = ssub.s32 %s16, %s42
    %p102 = scmp.eq.s32.totalorder %s101, 0
    %s104 = sadd.s32 %s103, 1
    %s105 = scalar_select %p102, %s103, %s104
    %p108 = pneg %p102
    %p109 = scmp.eq.s32.totalorder %s9, 1
    %p110 = por %p108, %p109
    %p111 = scmp.ne.s32.totalorder %s103, %s106
    %p112 = scmp.eq.s32.totalorder %s9, 0
    %p113 = por %p111, %p112
    %p114 = scmp.ne.s32.totalorder %s103, %s106
    %p115 = scmp.eq.s32.totalorder %s14, 1
    %p116 = por %p114, %p115
    %p117 = scmp.ne.s32.totalorder %s106, %s107
    %p118 = scmp.eq.s32.totalorder %s14, 0
    %p119 = por %p117, %p118
    %p120 = scmp.ne.s32.totalorder %s106, %s107
    %p121 = scmp.eq.s32.totalorder %s15, 1
    %p122 = por %p120, %p121
    %p124 = scmp.ne.s32.totalorder %s107, %s123
    %p125 = scmp.eq.s32.totalorder %s15, 0
    %p126 = por %p124, %p125
    %s127 = ssub.s32 %s17, %s38
    %s128 = ssub.s32 %s16, %s42
    %s129 = sor.u32 %s127, %s128
    %s130 = ssub.s32 %s18, %s34
    %s131 = sor.u32 %s129, %s130
    %p132 = scmp.eq.s32.totalorder %s131, 0
    %s134 = sadd.s32 %s133, 1
    %s135 = scalar_select %p132, %s133, %s134
    %p138 = pneg %p132
    %p139 = scmp.eq.s32.totalorder %s9, 1
    %p140 = por %p138, %p139
    %p141 = scmp.ne.s32.totalorder %s133, %s136
    %p142 = scmp.eq.s32.totalorder %s9, 0
    %p143 = por %p141, %p142
    %p144 = scmp.ne.s32.totalorder %s133, %s136
    %p145 = scmp.eq.s32.totalorder %s14, 1
    %p146 = por %p144, %p145
    %p147 = scmp.ne.s32.totalorder %s136, %s137
    %p148 = scmp.eq.s32.totalorder %s14, 0
    %p149 = por %p147, %p148
    %p150 = scmp.ne.s32.totalorder %s136, %s137
    %p151 = scmp.eq.s32.totalorder %s15, 1
    %p152 = por %p150, %p151
    %p154 = scmp.ne.s32.totalorder %s137, %s153
    %p155 = scmp.eq.s32.totalorder %s15, 0
    %p156 = por %p154, %p155
    %p157 = scmp.le.s32.totalorder 1, %s9
    %p158 = scmp.lt.s32.totalorder %s9, 3
    %p159 = pnand %p157, %p158
    %p160 = pneg %p159
    // Predicated region
    $region9: #{modulated_deform_conv2d.1} parent=5 // pred_check
      _
    $region10: #{modulated_deform_conv2d.1} parent=5 // pred_check_branch
      %162 = sbr.rel (%p159) target = $region12
    $region11: #{modulated_deform_conv2d.1} parent=5 // pred_region
      %s163 = ssub.s32 %s9, 1
      // Predicated region
      $region13: #{modulated_deform_conv2d.1} parent=11 // pred_check
        %p164 = pneg %p93
      $region14: #{modulated_deform_conv2d.1} parent=11 // pred_check_branch
        %166 = sbr.rel (%p164) target = $region16
      $region15: #{modulated_deform_conv2d.1} parent=11 // pred_region
        %p167 = scmp.lt.s32.totalorder %s20, 0
        %s168 = scalar_select %p167, %s20, 0
        %s169 = smul.addr %s168, 2
        %s170 = smul.addr %s169, 4
        %s171 = scalar_lea.vmem %s1, %s170
      $region16: #{modulated_deform_conv2d.1} parent=11 // pred_fallthru
        _
      // Predicated region
      $region17: #{modulated_deform_conv2d.1} parent=11 // pred_check
        %p172 = pneg %p119
      $region18: #{modulated_deform_conv2d.1} parent=11 // pred_check_branch
        %174 = sbr.rel (%p172) target = $region20
      $region19: #{modulated_deform_conv2d.1} parent=11 // pred_region
        %p175 = scmp.lt.s32.totalorder %s20, 0
        %s176 = scalar_select %p175, %s20, 0
        %s177 = smul.addr %s176, 2
        %s178 = smul.addr %s177, 8
        %s179 = scalar_lea.vmem %s2, %s178
      $region20: #{modulated_deform_conv2d.1} parent=11 // pred_fallthru
        _
    $region12: #{modulated_deform_conv2d.1} parent=5 // pred_fallthru
      _
    %p180 = scmp.lt.s32.totalorder %s9, 2
    // Predicated region
    $region21: #{modulated_deform_conv2d.1} parent=5 // pred_check
      %p181 = pneg %p180
    $region22: #{modulated_deform_conv2d.1} parent=5 // pred_check_branch
      %183 = sbr.rel (%p181) target = $region24
    $region23: #{modulated_deform_conv2d.1} parent=5 // pred_region
      // Predicated region
      $region25: #{modulated_deform_conv2d.1} parent=23 // pred_check
        %p184 = pneg %p61
      $region26: #{modulated_deform_conv2d.1} parent=23 // pred_check_branch
        %186 = sbr.rel (%p184) target = $region28
      $region27: #{modulated_deform_conv2d.1} parent=23 // pred_region
        %s187 = smul.u32 16, %s19
        %s188 = smul.u32 2, %s18
        %p189 = scmp.lt.s32.totalorder %s17, 1
        %s190 = scalar_select %p189, %s17, 1
        %p191 = scmp.lt.s32.totalorder %s16, 0
        %s192 = scalar_select %p191, %s16, 0
        %p193 = scmp.lt.s32.totalorder %s187, 15
        %s194 = scalar_select %p193, %s187, 15
        %p195 = scmp.lt.s32.totalorder %s188, 1
        %s196 = scalar_select %p195, %s188, 1
        %s197 = smul.addr %s194, 2
        %s198 = sadd.s32 %s196, %s197
        %s199 = smul.addr %s192, 32
        %s200 = sadd.s32 %s198, %s199
        %s201 = smul.addr %s190, 32
        %s202 = sadd.s32 %s200, %s201
        %s203 = smul.addr %s202, 4
        %s204 = scalar_lea.vmem %s0, %s203
        %s205 = smul.u32 16, %s19
        %s206 = smul.u32 2, %s18
      $region28: #{modulated_deform_conv2d.1} parent=23 // pred_fallthru
        _
    $region24: #{modulated_deform_conv2d.1} parent=5 // pred_fallthru
      _
    %p207 = scmp.le.s32.totalorder 1, %s9
    %p208 = scmp.lt.s32.totalorder %s9, 3
    %p209 = pnand %p207, %p208
    %p210 = pneg %p209
    // Predicated region
    $region29: #{modulated_deform_conv2d.1} parent=5 // pred_check
      _
    $region30: #{modulated_deform_conv2d.1} parent=5 // pred_check_branch
      %212 = sbr.rel (%p209) target = $region32
    $region31: #{modulated_deform_conv2d.1} parent=5 // pred_region
      %s213 = ssub.s32 %s9, 1
      %s214 = smul.u32 16, %s23
      %s215 = smul.u32 2, %s22
      %p216 = scmp.lt.s32.totalorder %s21, 1
      %s217 = scalar_select %p216, %s21, 1
      %p218 = scmp.lt.s32.totalorder %s20, 0
      %s219 = scalar_select %p218, %s20, 0
      %p220 = scmp.lt.s32.totalorder %s214, 15
      %s221 = scalar_select %p220, %s214, 15
      %p222 = scmp.lt.s32.totalorder %s215, 1
      %s223 = scalar_select %p222, %s215, 1
      %s224 = smul.addr %s221, 2
      %s225 = sadd.s32 %s223, %s224
      %s226 = smul.addr %s219, 32
      %s227 = sadd.s32 %s225, %s226
      %s228 = smul.addr %s217, 32
      %s229 = sadd.s32 %s227, %s228
      %s230 = smul.addr %s229, 4
      %s231 = scalar_lea.vmem %s0, %s230
      %p232 = pneg %p67
      %p233 = pneg %p64
      %p234 = scmp.lt.s32.totalorder %s20, 0
      %s235 = scalar_select %p234, %s20, 0
      %s236 = smul.addr %s235, 2
      %s237 = smul.addr %s236, 4
      %s238 = scalar_lea.vmem %s1, %s237
      %p239 = pneg %p93
      %p240 = pneg %p90
      %p241 = scmp.lt.s32.totalorder %s20, 0
      %s242 = scalar_select %p241, %s20, 0
      %s243 = smul.addr %s242, 2
      %s244 = smul.addr %s243, 8
      %s245 = scalar_lea.vmem %s2, %s244
      %p246 = pneg %p119
      %p247 = pneg %p116
      %p248 = pneg %p149
      %p249 = pneg %p146
      %s250 = smul.u32 2, %s22
      %p251 = scmp.lt.s32.totalorder %s21, 1
      %s252 = scalar_select %p251, %s21, 1
      %p253 = scmp.lt.s32.totalorder %s20, 0
      %s254 = scalar_select %p253, %s20, 0
      %p255 = scmp.lt.s32.totalorder %s250, 1
      %s256 = scalar_select %p255, %s250, 1
      %s257 = smul.addr %s254, 4
      %s258 = sadd.s32 %s256, %s257
      %s259 = smul.addr %s252, 4
      %s260 = sadd.s32 %s258, %s259
      %s261 = smul.addr %s260, 8
      %s262 = scalar_lea.vmem %s3, %s261
      %s263 = smul.u32 16, %s23
      %s264 = smul.u32 2, %s22
      %p265 = scmp.lt.s32.totalorder %s21, 1
      %s266 = scalar_select %p265, %s21, 1
      %p267 = scmp.lt.s32.totalorder %s20, 0
      %s268 = scalar_select %p267, %s20, 0
      %p269 = scmp.lt.s32.totalorder %s263, 15
      %s270 = scalar_select %p269, %s263, 15
      %p271 = scmp.lt.s32.totalorder %s264, 1
      %s272 = scalar_select %p271, %s264, 1
      %s273 = smul.addr %s270, 2
      %s274 = sadd.s32 %s272, %s273
      %s275 = smul.addr %s268, 32
      %s276 = sadd.s32 %s274, %s275
      %s277 = smul.addr %s266, 32
      %s278 = sadd.s32 %s276, %s277
      %s279 = smul.addr %s278, 4
      %s280 = scalar_lea.vmem %s0, %s279
      %s281 = smul.u32 16, %s23
      %s282 = smul.u32 2, %s22
      %p283 = scmp.lt.s32.totalorder %s20, 0
      %s284 = scalar_select %p283, %s20, 0
      %s285 = smul.addr %s284, 2
      %s286 = smul.addr %s285, 4
      %s287 = scalar_lea.vmem %s1, %s286
      %p288 = scmp.lt.s32.totalorder %s20, 0
      %s289 = scalar_select %p288, %s20, 0
      %s290 = smul.addr %s289, 2
      %s291 = smul.addr %s290, 8
      %s292 = scalar_lea.vmem %s2, %s291
      %s293 = smul.u32 2, %s22
      %p294 = scmp.lt.s32.totalorder %s21, 1
      %s295 = scalar_select %p294, %s21, 1
      %p296 = scmp.lt.s32.totalorder %s20, 0
      %s297 = scalar_select %p296, %s20, 0
      %p298 = scmp.lt.s32.totalorder %s293, 1
      %s299 = scalar_select %p298, %s293, 1
      %s300 = smul.addr %s297, 4
      %s301 = sadd.s32 %s299, %s300
      %s302 = smul.addr %s295, 4
      %s303 = sadd.s32 %s301, %s302
      %s304 = smul.addr %s303, 8
      %s305 = scalar_lea.vmem %s3, %s304
      %s306 = smul.u32 2, %s22
      %p307 = scmp.eq.s32.totalorder %s23, 0
      // Predicated region
      $region33: #{modulated_deform_conv2d.1} parent=31 // pred_check
        %p308 = pneg %p307
      $region34: #{modulated_deform_conv2d.1} parent=31 // pred_check_branch
        %310 = sbr.rel (%p308) target = $region36
      $region35: #{modulated_deform_conv2d.1} parent=31 // pred_region
        %311 = vst [vmem:[#allocation2] sm:$0xff] 0.0
        %312 = vst [vmem:[#allocation2 + $0x8] sm:$0xff] 0.0
        %313 = vst [vmem:[#allocation2 + $0x10] sm:$0xff] 0.0
        %314 = vst [vmem:[#allocation2 + $0x18] sm:$0xff] 0.0
      $region36: #{modulated_deform_conv2d.1} parent=31 // pred_fallthru
        _
      %s315 = smul.u32 %s23, 128
      %s316 = sshra.s32 %s315, 7
      %s317 = sand.u32 %s315, 127
      %s318 = smul.addr %s316, 4
      %s319 = scalar_lea.vmem %s287, %s318
      %v320 = vld [vmem:[%s319] sm:$0xf]
      %v321 = vld [vmem:[%s319 + $0x4] sm:$0xf]
      %v322 = vld [vmem:[#allocation2] sm:$0xff]
      %v323 = vld [vmem:[#allocation2 + $0x8] sm:$0xff]
      %v324 = vld [vmem:[#allocation2 + $0x10] sm:$0xff]
      %v325 = vld [vmem:[#allocation2 + $0x18] sm:$0xff]
      %v326 = vld [vmem:[%s280] sm:$0xff]
      %v327 = vld [vmem:[%s280 + $0x8] sm:$0xff]
      %v328 = vld [vmem:[%s280 + $0x10] sm:$0xff]
      %v329 = vld [vmem:[%s280 + $0x18] sm:$0xff]
      %v330 = vld [vmem:[%s280 + $0x20] sm:$0xff]
      %v331 = vld [vmem:[%s280 + $0x28] sm:$0xff]
      %v332 = vld [vmem:[%s280 + $0x30] sm:$0xff]
      %v333 = vld [vmem:[%s280 + $0x38] sm:$0xff]
      %v334 = vld [vmem:[%s280 + $0x40] sm:$0xff]
      %v335 = vld [vmem:[%s280 + $0x48] sm:$0xff]
      %v336 = vld [vmem:[%s280 + $0x50] sm:$0xff]
      %v337 = vld [vmem:[%s280 + $0x58] sm:$0xff]
      %v338 = vld [vmem:[%s280 + $0x60] sm:$0xff]
      %v339 = vld [vmem:[%s280 + $0x68] sm:$0xff]
      %v340 = vld [vmem:[%s280 + $0x70] sm:$0xff]
      %v341 = vld [vmem:[%s280 + $0x78] sm:$0xff]
      %v344 = vunpack.c.l.b16 %v320
      %v345 = vunpack.c.l.b16 %v321
      %v346 = vpack.c.b16 %v345, %v344
      %v364 = vunpack.c.l.b16 %v326
      %v365 = vunpack.c.h.b16 %v326
      %v366 = vunpack.c.l.b16 %v327
      %v367 = vunpack.c.h.b16 %v327
      %v368 = vunpack.c.l.b16 %v328
      %v369 = vunpack.c.h.b16 %v328
      %v370 = vunpack.c.l.b16 %v329
      %v371 = vunpack.c.h.b16 %v329
      %v372 = vunpack.c.l.b16 %v330
      %v373 = vunpack.c.h.b16 %v330
      %v374 = vunpack.c.l.b16 %v331
      %v375 = vunpack.c.h.b16 %v331
      %v376 = vunpack.c.l.b16 %v332
      %v377 = vunpack.c.h.b16 %v332
      %v378 = vunpack.c.l.b16 %v333
      %v379 = vunpack.c.h.b16 %v333
      %v380 = vunpack.c.l.b16 %v334
      %v381 = vunpack.c.h.b16 %v334
      %v382 = vunpack.c.l.b16 %v335
      %v383 = vunpack.c.h.b16 %v335
      %v384 = vunpack.c.l.b16 %v336
      %v385 = vunpack.c.h.b16 %v336
      %v386 = vunpack.c.l.b16 %v337
      %v387 = vunpack.c.h.b16 %v337
      %v388 = vunpack.c.l.b16 %v338
      %v389 = vunpack.c.h.b16 %v338
      %v390 = vunpack.c.l.b16 %v339
      %v391 = vunpack.c.h.b16 %v339
      %v392 = vunpack.c.l.b16 %v340
      %v393 = vunpack.c.h.b16 %v340
      %v394 = vunpack.c.l.b16 %v341
      %v395 = vunpack.c.h.b16 %v341
      %v396 = vpack.c.b16 %v366, %v364
      %v397 = vpack.c.b16 %v367, %v365
      %v398 = vpack.c.b16 %v370, %v368
      %v399 = vpack.c.b16 %v371, %v369
      %v400 = vpack.c.b16 %v374, %v372
      %v401 = vpack.c.b16 %v375, %v373
      %v402 = vpack.c.b16 %v378, %v376
      %v403 = vpack.c.b16 %v379, %v377
      %v404 = vpack.c.b16 %v382, %v380
      %v405 = vpack.c.b16 %v383, %v381
      %v406 = vpack.c.b16 %v386, %v384
      %v407 = vpack.c.b16 %v387, %v385
      %v408 = vpack.c.b16 %v390, %v388
      %v409 = vpack.c.b16 %v391, %v389
      %v410 = vpack.c.b16 %v394, %v392
      %v411 = vpack.c.b16 %v395, %v393
      %428 = vmatpush.bf16.msra.mxu0 %v410
      %429 = vmatpush.bf16.msra.mxu0 %v408
      %430 = vmatpush.bf16.msra.mxu0 %v406
      %431 = vmatpush.bf16.msra.mxu0 %v404
      %432 = vmatpush.bf16.msra.mxu0 %v402
      %433 = vmatpush.bf16.msra.mxu0 %v400
      %434 = vmatpush.bf16.msra.mxu0 %v398
      %435 = vmatpush.bf16.msra.mxu0 %v396
      %436 = vmatmul.bf16.gmra.mxu0 %v346
      %v437 = vpop.f32.mrf.mxu0
      %v438 = vadd.f32 0.0, %v437
      %v439 = vpop.f32.mrf.mxu0
      %v440 = vadd.f32 0.0, %v439
      %441 = vdwg.mxu0
      %442 = vmatpush.bf16.msra.mxu0 %v411
      %443 = vmatpush.bf16.msra.mxu0 %v409
      %444 = vmatpush.bf16.msra.mxu0 %v407
      %445 = vmatpush.bf16.msra.mxu0 %v405
      %446 = vmatpush.bf16.msra.mxu0 %v403
      %447 = vmatpush.bf16.msra.mxu0 %v401
      %448 = vmatpush.bf16.msra.mxu0 %v399
      %449 = vmatpush.bf16.msra.mxu0 %v397
      %450 = vmatmul.bf16.gmra.mxu0 %v346
      %v451 = vpop.f32.mrf.mxu0
      %v452 = vadd.f32 0.0, %v451
      %v453 = vpop.f32.mrf.mxu0
      %v454 = vadd.f32 0.0, %v453
      %455 = vdwg.mxu0
      %v456 = vadd.f32 %v322, %v438
      %v457 = vadd.f32 %v323, %v452
      %v458 = vadd.f32 %v324, %v440
      %v459 = vadd.f32 %v325, %v454
      %460 = vst [vmem:[#allocation2] sm:$0xff] %v456
      %461 = vst [vmem:[#allocation2 + $0x8] sm:$0xff] %v457
      %462 = vst [vmem:[#allocation2 + $0x10] sm:$0xff] %v458
      %463 = vst [vmem:[#allocation2 + $0x18] sm:$0xff] %v459
      // Predicated region
      $region37: #{modulated_deform_conv2d.1} parent=31 // pred_check
        %p464 = pneg %p307
      $region38: #{modulated_deform_conv2d.1} parent=31 // pred_check_branch
        %466 = sbr.rel (%p464) target = $region40
      $region39: #{modulated_deform_conv2d.1} parent=31 // pred_region
        %v467 = vld [vmem:[#allocation2] sm:$0xff]
        %v468 = vld [vmem:[#allocation2 + $0x8] sm:$0xff]
        %v469 = vld [vmem:[#allocation2 + $0x10] sm:$0xff]
        %v470 = vld [vmem:[#allocation2 + $0x18] sm:$0xff]
        %v471 = vld [vmem:[%s292] sm:$0xff]
        %v472 = vld [vmem:[%s292 + $0x8] sm:$0xff]
        %474 = vset.pattern.permute.xlu0 0
        %475 = vperm.xlu0 %474, %v471
        %v476 = vpop.permute.xlu0 %475
        %479 = vset.pattern.permute.xlu0 0
        %480 = vperm.xlu0 %479, %v472
        %v481 = vpop.permute.xlu0 %480
        %v483 = vadd.f32 %v467, %v476
        %v484 = vadd.f32 %v468, %v476
        %v485 = vadd.f32 %v469, %v481
        %v486 = vadd.f32 %v470, %v481
        %487 = vst [vmem:[%s305] sm:$0xff] %v483
        %488 = vst [vmem:[%s305 + $0x8] sm:$0xff] %v484
        %489 = vst [vmem:[%s305 + $0x10] sm:$0xff] %v485
        %490 = vst [vmem:[%s305 + $0x18] sm:$0xff] %v486
      $region40: #{modulated_deform_conv2d.1} parent=31 // pred_fallthru
        _
      %s491 = smul.u32 2, %s22
      %p492 = scmp.lt.s32.totalorder %s21, 1
      %s493 = scalar_select %p492, %s21, 1
      %p494 = scmp.lt.s32.totalorder %s20, 0
      %s495 = scalar_select %p494, %s20, 0
      %p496 = scmp.lt.s32.totalorder %s491, 1
      %s497 = scalar_select %p496, %s491, 1
      %s498 = smul.addr %s495, 4
      %s499 = sadd.s32 %s497, %s498
      %s500 = smul.addr %s493, 4
      %s501 = sadd.s32 %s499, %s500
      %s502 = smul.addr %s501, 8
      %s503 = scalar_lea.vmem %s3, %s502
      // Predicated region
      $region41: #{modulated_deform_conv2d.1} parent=31 // pred_check
        %p504 = pneg %p146
      $region42: #{modulated_deform_conv2d.1} parent=31 // pred_check_branch
        %506 = sbr.rel (%p504) target = $region44
      $region43: #{modulated_deform_conv2d.1} parent=31 // pred_region
        %s507 = smul.u32 2, %s22
      $region44: #{modulated_deform_conv2d.1} parent=31 // pred_fallthru
        _
    $region32: #{modulated_deform_conv2d.1} parent=5 // pred_fallthru
      _
    %p508 = scmp.le.s32.totalorder 2, %s9
    // Predicated region
    $region45: #{modulated_deform_conv2d.1} parent=5 // pred_check
      %p509 = pneg %p508
    $region46: #{modulated_deform_conv2d.1} parent=5 // pred_check_branch
      %511 = sbr.rel (%p509) target = $region48
    $region47: #{modulated_deform_conv2d.1} parent=5 // pred_region
      %s512 = ssub.s32 %s9, 2
      // Predicated region
      $region49: #{modulated_deform_conv2d.1} parent=47 // pred_check
        %p513 = pneg %p152
      $region50: #{modulated_deform_conv2d.1} parent=47 // pred_check_branch
        %515 = sbr.rel (%p513) target = $region52
      $region51: #{modulated_deform_conv2d.1} parent=47 // pred_region
        %s516 = smul.u32 2, %s26
        %p517 = scmp.lt.s32.totalorder %s25, 1
        %s518 = scalar_select %p517, %s25, 1
        %p519 = scmp.lt.s32.totalorder %s24, 0
        %s520 = scalar_select %p519, %s24, 0
        %p521 = scmp.lt.s32.totalorder %s516, 1
        %s522 = scalar_select %p521, %s516, 1
        %s523 = smul.addr %s520, 4
        %s524 = sadd.s32 %s522, %s523
        %s525 = smul.addr %s518, 4
        %s526 = sadd.s32 %s524, %s525
        %s527 = smul.addr %s526, 8
        %s528 = scalar_lea.vmem %s3, %s527
      $region52: #{modulated_deform_conv2d.1} parent=47 // pred_fallthru
        _
    $region48: #{modulated_deform_conv2d.1} parent=5 // pred_fallthru
      _
  $region6: #{modulated_deform_conv2d.1} parent=0 // loop_footer
    %s13 = sadd.s32 1, %s9
  $region7: #{modulated_deform_conv2d.1} parent=0 // loop_footer_branch
    %8 = sbr.rel target = $region3
  $region8: #{modulated_deform_conv2d.1} parent=0 // loop_exit
    _

</llo_original>
